<compile_context>
chip_gen: v7x
topology: tpu7x:2x2x1
jax: 0.10.0
libtpu: 0.0.40
codegen_flags: <defaults>
</compile_context>

<pallas_src>
import jax
import jax.numpy as jnp
from jax.experimental import pallas as pl
from jax.experimental.pallas import tpu as pltpu

_MIB = 1024 * 1024


def _pact_relu_kernel(x_ref, p_ref, o_ref):
    # Upcast to f32 for the cube/tanh math; params are already f32.
    x = x_ref[...].astype(jnp.float32)      # (tile_rows, tile_F)
    a = p_ref[0:1, :]                       # (1, tile_F) -> broadcasts over rows
    b = p_ref[1:2, :]                       # (1, tile_F)
    c = p_ref[2:3, :]                       # (1, tile_F) precomputed (1 - a - b)
    relu_x = jnp.maximum(x, 0.0)            # VPU
    cube_x = x * x * x                      # VPU
    tanh_x = jnp.tanh(x)                    # EUP (hidden under DMA at large tiles)
    o_ref[...] = (a * relu_x + b * cube_x + c * tanh_x).astype(o_ref.dtype)


def _vmem_capacity_bytes():
    try:
        return int(pltpu.get_tpu_info().vmem_capacity_bytes)
    except Exception:
        return 64 * _MIB  # conservative: v7x per-TensorCore VMEM


def _num_tensorcores():
    try:
        return max(1, int(getattr(jax.devices()[0], "num_cores", 1) or 1))
    except Exception:
        return 1


def _round_down(v, m):
    return max(m, (v // m) * m)


def _choose_tiles(M, F, itemsize, target_block_bytes):
    """Pick (tile_rows, tile_F): lane-dense, (8,128)-legal, ~target-sized."""
    if 8 * F * itemsize <= target_block_bytes:
        # Whole feature axis per block; tile only the batch (sublane) axis.
        tile_F = F
        tile_rows = _round_down(target_block_bytes // max(1, F * itemsize), 8)
        if tile_rows >= M:
            tile_rows = M            # full dim is always a legal block extent
    else:
        # Very wide F: keep 8 rows and tile the lane axis in multiples of 128.
        tile_rows = M if M < 8 else 8
        tile_F = _round_down(target_block_bytes // (8 * itemsize), 128)
        if tile_F >= F:
            tile_F = F
    return tile_rows, tile_F


def p_act_relu(x, a, b, *, target_block_bytes=4 * _MIB, vmem_limit_bytes=None):
    """x: (M, F); a, b: (F,). Returns a*relu(x) + b*x^3 + (1-a-b)*tanh(x)."""
    M, F = x.shape
    dt = x.dtype
    itemsize = jnp.dtype(dt).itemsize

    # Keep parameters (and precomputed c) in float32 so bf16 inputs don't
    # quantize the coefficients; only the final result is cast to x.dtype.
    a32 = a.astype(jnp.float32)
    b32 = b.astype(jnp.float32)
    params = jnp.stack([a32, b32, 1.0 - a32 - b32], axis=0)        # (3, F) f32

    # Lane packing for narrow F: fold rows into lanes so the output last dim
    # is >= 128 (avoids masked partial stores).
    pack = 1
    if F < 128 and 128 % F == 0:
        k = 128 // F
        if M % k == 0 and M // k >= 1:
            pack = k
    if pack > 1:
        x_run = x.reshape(M // pack, pack * F)
        params_run = jnp.tile(params, (1, pack))
    else:
        x_run = x
        params_run = params
    Mr, Fr = x_run.shape

    tile_rows, tile_F = _choose_tiles(Mr, Fr, itemsize, target_block_bytes)

    # Only force a multi-step row split on parts that actually have >1 TC
    # (v7x megacore); on single-TC v5e/v6e the extra step is pure overhead.
    n_cores = _num_tensorcores()
    if n_cores > 1 and pl.cdiv(Mr, tile_rows) < 2 and Mr > 8:
        half = (Mr + 1) // 2
        split = ((half + 7) // 8) * 8
        if split < Mr:
            tile_rows = split

    grid = (pl.cdiv(Mr, tile_rows), pl.cdiv(Fr, tile_F))

    # Explicit VMEM budget: double-buffered in + out blocks + resident params,
    # clamped to the chip's physical VMEM (v7x: 64 MiB per TensorCore).
    block_bytes = tile_rows * tile_F * itemsize
    param_bytes = 8 * tile_F * 4              # (3, tile_F) f32, 8-sublane padded
    need = 4 * block_bytes + 2 * param_bytes
    if vmem_limit_bytes is None:
        vmem_limit_bytes = min(_vmem_capacity_bytes(),
                               max(32 * _MIB, need + 8 * _MIB))
    vmem_limit_bytes = int(vmem_limit_bytes)

    cost = pl.CostEstimate(
        flops=8 * Mr * Fr,
        transcendentals=Mr * Fr,
        bytes_accessed=2 * Mr * Fr * itemsize + params_run.size * 4,
    )

    out = pl.pallas_call(
        _pact_relu_kernel,
        out_shape=jax.ShapeDtypeStruct((Mr, Fr), dt),
        grid_spec=pltpu.PrefetchScalarGridSpec(
            num_scalar_prefetch=0,
            grid=grid,
            in_specs=[
                pl.BlockSpec((tile_rows, tile_F), lambda i, j: (i, j)),
                pl.BlockSpec((3, tile_F), lambda i, j: (0, j)),   # resident params
            ],
            out_specs=pl.BlockSpec((tile_rows, tile_F), lambda i, j: (i, j)),
        ),
        compiler_params=pltpu.CompilerParams(
            dimension_semantics=("parallel", "parallel"),
            vmem_limit_bytes=vmem_limit_bytes,
        ),
        cost_estimate=cost,
    )(x_run, params_run)

    if pack > 1:
        out = out.reshape(M, F)
    return out


if __name__ == "__main__":
    key = jax.random.PRNGKey(0)
    kx, ka = jax.random.split(key)

    batch, input_features = 16, 128
    args = {"rand_act": True}

    # Deterministic parameter init mirroring p_act_relu.__init__:
    if args["rand_act"]:
        a = 0.8 + jax.random.uniform(ka, (input_features,), jnp.float32) / 5.0
    else:
        a = jnp.ones((input_features,), jnp.float32)
    b = jnp.zeros((input_features,), jnp.float32)

    x = jax.random.normal(kx, (batch, input_features), jnp.float32)

    out = jax.block_until_ready(p_act_relu(x, a, b))

    # Reference check in plain JAX.
    ref = a * jnp.maximum(x, 0.0) + b * x ** 3 + (1.0 - a - b) * jnp.tanh(x)
    assert out.shape == (batch, input_features)
    assert jnp.allclose(out, ref, atol=1e-5, rtol=1e-5)

    # TODO(synk): backward pass (para_act_relu.backward) not implemented; only
    # the forward semantics are provided as a Pallas kernel.
    print("KERNEL_OK")
</pallas_src>

<mosaic_0001>
module attributes {stable_mosaic.version = 11 : i64} {
  func.func @_pact_relu_kernel(%arg0: i32, %arg1: i32, %arg2: memref<16x128xf32, #tpu.memory_space<vmem>>, %arg3: memref<3x128xf32, #tpu.memory_space<vmem>>, %arg4: memref<16x128xf32, #tpu.memory_space<vmem>>) attributes {dimension_semantics = [#tpu.dimension_semantics<parallel>, #tpu.dimension_semantics<parallel>], iteration_bounds = array<i64: 1, 1>, scalar_prefetch = 0 : i64, scratch_operands = 0 : i64, tpu.core_type = #tpu.core_type<tc>, window_params = [{transform_indices = @transform_0, window_bounds = array<i64: 16, 128>}, {transform_indices = @transform_1, window_bounds = array<i64: 3, 128>}, {transform_indices = @transform_2, window_bounds = array<i64: 16, 128>}]} {
    %c0 = arith.constant 0 : index
    %c0_0 = arith.constant 0 : index
    %0 = vector.load %arg2[%c0, %c0_0] : memref<16x128xf32, #tpu.memory_space<vmem>>, vector<16x128xf32>
    %c0_1 = arith.constant 0 : index
    %c0_2 = arith.constant 0 : index
    %1 = vector.load %arg3[%c0_1, %c0_2] : memref<3x128xf32, #tpu.memory_space<vmem>>, vector<1x128xf32>
    %c1 = arith.constant 1 : index
    %c0_3 = arith.constant 0 : index
    %2 = vector.load %arg3[%c1, %c0_3] : memref<3x128xf32, #tpu.memory_space<vmem>>, vector<1x128xf32>
    %c2 = arith.constant 2 : index
    %c0_4 = arith.constant 0 : index
    %3 = vector.load %arg3[%c2, %c0_4] : memref<3x128xf32, #tpu.memory_space<vmem>>, vector<1x128xf32>
    %cst = arith.constant 0.000000e+00 : f32
    %4 = vector.broadcast %cst : f32 to vector<16x128xf32>
    %5 = arith.maximumf %0, %4 : vector<16x128xf32>
    %6 = arith.mulf %0, %0 : vector<16x128xf32>
    %7 = arith.mulf %6, %0 : vector<16x128xf32>
    %8 = math.tanh %0 : vector<16x128xf32>
    %9 = vector.broadcast %1 : vector<1x128xf32> to vector<16x128xf32>
    %10 = arith.mulf %9, %5 : vector<16x128xf32>
    %11 = vector.broadcast %2 : vector<1x128xf32> to vector<16x128xf32>
    %12 = arith.mulf %11, %7 : vector<16x128xf32>
    %13 = arith.addf %10, %12 : vector<16x128xf32>
    %14 = vector.broadcast %3 : vector<1x128xf32> to vector<16x128xf32>
    %15 = arith.mulf %14, %8 : vector<16x128xf32>
    %16 = arith.addf %13, %15 : vector<16x128xf32>
    %c0_5 = arith.constant 0 : index
    %c0_6 = arith.constant 0 : index
    %17 = vector.load %arg4[%c0_5, %c0_6] : memref<16x128xf32, #tpu.memory_space<vmem>>, vector<16x128xf32>
    tpu.vector_store %arg4[%c0_5, %c0_6], %16 {strides = array<i32>} : memref<16x128xf32, #tpu.memory_space<vmem>>, vector<16x128xf32>,
    return
  }
  func.func @transform_0(%arg0: i32, %arg1: i32) -> (i32, i32) {
    %c0_i32 = arith.constant 0 : i32
    return %arg0, %arg1 : i32, i32
  }
  func.func @transform_1(%arg0: i32, %arg1: i32) -> (i32, i32) {
    %c0_i32 = arith.constant 0 : i32
    %c0_i32_0 = arith.constant 0 : i32
    return %c0_i32, %arg1 : i32, i32
  }
  func.func @transform_2(%arg0: i32, %arg1: i32) -> (i32, i32) {
    %c0_i32 = arith.constant 0 : i32
    return %arg0, %arg1 : i32, i32
  }
}

</mosaic_0001>

<llo_original>
// kernel: tpu_custom_call.1
$region0: #{tpu_custom_call.1}
  #allocation0 [shape = 'u32[]', space=smem, size = 0x4, offset = 0x4, fixed_abs, tag = 'smem constant byte address 0x4 - core index']
  #allocation1 [shape = 'u32[144,128]{1,0:T(1,128)}', space=vmem, size = 0x12000, scoped, tag = 'internal scratch']
  %s0 = inlined_call_operand.hbm [shape: f32[16,128], index: 0, kind: input, shape index: {}]
  %s1 = inlined_call_operand.hbm [shape: f32[3,128], index: 1, kind: input, shape index: {}]
  %s2 = inlined_call_operand.hbm [shape: f32[16,128], index: 2, kind: output, shape index: {}]
  %s3 = sld [smem:[#allocation0]]
  $region26: #{tpu_custom_call.1} parent=0
    _
  %s5 = ssub.s32 1, %s3
  %s6 = scalar_select 0, %s5, %s3
  $region1: #{tpu_custom_call.1} parent=0
    #allocation2 [shape = 'u8[8192]{0}', space=vmem, size = 0x2000, scoped, tag = 'input window, operand 0, single buffered']
    #allocation3 [shape = 's32[1]{0}', space=sflag, size = 0x4, scoped, tag = 'scoped memory for tpu_custom_call.1']
    #allocation4 [shape = 's32[1]{0}', space=sflag, size = 0x4, scoped, tag = 'scoped memory for tpu_custom_call.1']
    #allocation5 [shape = 'u8[2048]{0}', space=vmem, size = 0x800, scoped, tag = 'input window, operand 1, single buffered']
    #allocation6 [shape = 's32[1]{0}', space=sflag, size = 0x4, scoped, tag = 'scoped memory for tpu_custom_call.1']
    #allocation7 [shape = 'u8[8192]{0}', space=vmem, size = 0x2000, scoped, tag = 'output window, operand 0, single buffered']
    %7 = vsyncpa [#allocation3], 0
    %8 = vsyncpa [#allocation6], 0
    %9 = vsyncpa [#allocation4], 0
    // Predicated region
    $region2: #{tpu_custom_call.1} parent=1 // pred_check
      _
    $region3: #{tpu_custom_call.1} parent=1 // pred_check_branch
      %11 = sbr.rel (0) target = $region5
    $region4: #{tpu_custom_call.1} parent=1 // pred_region
      %s13 = ssub.s32 256, 256
      %14 = vsyncadd [#allocation3], %s13
      %s15 = sshll.u32 [#allocation2], 4
      %s16 = int_to_ptr.vmem [resolvable:$true] %s15
      %21 = dma.hbm_to_vmem [thread:$0]  %s0, 256, %s16, [#allocation3], 128, 128, 8
    $region5: #{tpu_custom_call.1} parent=1 // pred_fallthru
      _
    // Predicated region
    $region6: #{tpu_custom_call.1} parent=1 // pred_check
      _
    $region7: #{tpu_custom_call.1} parent=1 // pred_check_branch
      %23 = sbr.rel (0) target = $region9
    $region8: #{tpu_custom_call.1} parent=1 // pred_region
      %s25 = ssub.s32 64, 64
      %26 = vsyncadd [#allocation6], %s25
      %s28 = sshll.u32 [#allocation5], 4
      %s29 = int_to_ptr.vmem [resolvable:$true] %s28
      %31 = dma.hbm_to_vmem [thread:$0]  %s1, 64, %s29, [#allocation6]
    $region9: #{tpu_custom_call.1} parent=1 // pred_fallthru
      _
    // Predicated region
    $region10: #{tpu_custom_call.1} parent=1 // pred_check
      _
    $region11: #{tpu_custom_call.1} parent=1 // pred_check_branch
      %33 = sbr.rel (0) target = $region13
    $region12: #{tpu_custom_call.1} parent=1 // pred_region
      %34 = dma.done [#allocation3], 256
    $region13: #{tpu_custom_call.1} parent=1 // pred_fallthru
      _
    // Predicated region
    $region14: #{tpu_custom_call.1} parent=1 // pred_check
      _
    $region15: #{tpu_custom_call.1} parent=1 // pred_check_branch
      %36 = sbr.rel (0) target = $region17
    $region16: #{tpu_custom_call.1} parent=1 // pred_region
      %37 = dma.done [#allocation6], 64
    $region17: #{tpu_custom_call.1} parent=1 // pred_fallthru
      _
    %v38 = vld [vmem:[#allocation2] sm:$0xff]
    %v39 = vld [vmem:[#allocation2 + $0x8] sm:$0xff]
    %v40 = vld [vmem:[#allocation5] sm:$0x1]
    %v41 = vld [vmem:[#allocation5 + $0x1] sm:$0x1]
    %v42 = vld [vmem:[#allocation5 + $0x2] sm:$0x1]
    %v43 = vmax.f32 %v38, 0.0
    %v44 = vmax.f32 %v39, 0.0
    %v45 = vmul.f32 %v38, %v38
    %v46 = vmul.f32 %v39, %v39
    %v47 = vmul.f32 %v45, %v38
    %v48 = vmul.f32 %v46, %v39
    %v49 = vtanh.pop %v38
    %v50 = vtanh.pop %v39
    %v51 = vlaneseq
    %v52 = vshrl.u32 %v51, 7
    %v53 = vsub.s32 0, %v52
    %v54 = vrot.slane %v40, %v53
    %v55 = vmul.f32 %v54, %v43
    %v56 = vmul.f32 %v54, %v44
    %v57 = vlaneseq
    %v58 = vshrl.u32 %v57, 7
    %v59 = vsub.s32 0, %v58
    %v60 = vrot.slane %v41, %v59
    %v61 = vmul.f32 %v60, %v47
    %v62 = vmul.f32 %v60, %v48
    %v63 = vadd.f32 %v55, %v61
    %v64 = vadd.f32 %v56, %v62
    %v65 = vlaneseq
    %v66 = vshrl.u32 %v65, 7
    %v67 = vsub.s32 0, %v66
    %v68 = vrot.slane %v42, %v67
    %v69 = vmul.f32 %v68, %v49
    %v70 = vmul.f32 %v68, %v50
    %v71 = vadd.f32 %v63, %v69
    %v72 = vadd.f32 %v64, %v70
    %73 = vst [vmem:[#allocation7] sm:$0xff] %v71
    %74 = vst [vmem:[#allocation7 + $0x8] sm:$0xff] %v72
    // Predicated region
    $region18: #{tpu_custom_call.1} parent=1 // pred_check
      _
    $region19: #{tpu_custom_call.1} parent=1 // pred_check_branch
      %76 = sbr.rel (0) target = $region21
    $region20: #{tpu_custom_call.1} parent=1 // pred_region
      %s78 = ssub.s32 256, 256
      %79 = vsyncadd [#allocation4], %s78
      %s80 = sshll.u32 [#allocation7], 4
      %s81 = int_to_ptr.vmem [resolvable:$true] %s80
      %86 = dma.vmem_to_hbm [thread:$0]  %s81, 256, %s2, [#allocation4], 128, 128, 8
    $region21: #{tpu_custom_call.1} parent=1 // pred_fallthru
      _
    // Predicated region
    $region22: #{tpu_custom_call.1} parent=1 // pred_check
      _
    $region23: #{tpu_custom_call.1} parent=1 // pred_check_branch
      %88 = sbr.rel (0) target = $region25
    $region24: #{tpu_custom_call.1} parent=1 // pred_region
      %89 = dma.done [#allocation4], 256
    $region25: #{tpu_custom_call.1} parent=1 // pred_fallthru
      _
    %90 = vsyncpa [#allocation3], 1
    %91 = vsyncpa [#allocation6], 1
    %92 = vsyncpa [#allocation4], 1

</llo_original>
